<compile_context>
chip_gen: v6e
topology: v6e:2x2x1
jax: 0.10.0
libtpu: 0.0.40
codegen_flags: <defaults>
</compile_context>

<pallas_src>
import math
from functools import partial

import jax
import jax.numpy as jnp
import numpy as np
from jax.experimental import pallas as pl
from jax.experimental.pallas import tpu as pltpu


def _round_up(x, m):
    return ((x + m - 1) // m) * m


def _bucket_rows(ml):
    """Bucket the padded row count to a power of two >= 8 (shape-stable kernel)."""
    ml = max(int(ml), 1)
    return max(8, 1 << (ml - 1).bit_length())


def _choose_tm(ml_pad, hp, batch):
    """Row-tile size: biggest power of two whose double-buffered per-step VMEM
    footprint (out tile TM*Hp*4 + x tile TM*128*4, the 4-wide minor dim lane-pads
    to 128 in VMEM) stays under an 8 MiB budget -- safe on v5e/v6e/v7x."""
    budget = 8 * 1024 * 1024
    per_row = 2 * 4 * (hp + 128)          # bytes per row, double-buffered
    tm_cap = max(8, budget // per_row)
    tm_cap = 1 << (tm_cap.bit_length() - 1)   # round down to power of two
    tm = min(ml_pad, tm_cap)
    # Give v7x's second TensorCore at least 2 grid steps when possible.
    if batch * (ml_pad // tm) < 2 and ml_pad >= 16:
        tm = ml_pad // 2
    return tm


def _rect_encode_kernel(x_ref, w_ref, b_ref, o_ref):
    # x_ref: (TM, 4)   f32  -- row tile of one sample's zero-padded boxes
    # w_ref: (4, Hp)   f32  -- lane-padded weight, resident (constant index_map)
    # b_ref: (1, Hp)   f32  -- lane-padded bias, resident
    # o_ref: (TM, Hp)  f32  -- lane block [b*Hp, (b+1)*Hp) of the output slab
    acc = jnp.dot(x_ref[...], w_ref[...], preferred_element_type=jnp.float32)
    o_ref[...] = (acc + b_ref[...]).astype(o_ref.dtype)


def rectangle_encoder_pallas(x_pad, w_pad, b_pad):
    """x_pad: (B, ml_pad, 4) f32, w_pad: (4, Hp) f32, b_pad: (1, Hp) f32
    -> (ml_pad, B*Hp) f32 with batch b in lanes [b*Hp, (b+1)*Hp)."""
    B, ml_pad, K = x_pad.shape
    Hp = w_pad.shape[1]
    TM = _choose_tm(ml_pad, Hp, B)
    grid = (B, ml_pad // TM)
    return pl.pallas_call(
        _rect_encode_kernel,
        out_shape=jax.ShapeDtypeStruct((ml_pad, B * Hp), jnp.float32),
        grid_spec=pltpu.PrefetchScalarGridSpec(
            num_scalar_prefetch=0,
            grid=grid,
            in_specs=[
                pl.BlockSpec((None, TM, K), lambda b, m: (b, m, 0)),
                pl.BlockSpec((K, Hp), lambda b, m: (0, 0)),   # resident weight
                pl.BlockSpec((1, Hp), lambda b, m: (0, 0)),   # resident bias
            ],
            out_specs=pl.BlockSpec((TM, Hp), lambda b, m: (m, b)),
        ),
        compiler_params=pltpu.CompilerParams(
            dimension_semantics=("parallel", "parallel"),
            vmem_limit_bytes=32 * 1024 * 1024,
        ),
    )(x_pad, w_pad, b_pad)


@partial(jax.jit, static_argnames=("ml", "hidden"))
def _encode_fused(x_pad, w_pad, b_pad, *, ml, hidden):
    """One dispatch: pallas_call + free reshape + slice + per-sample extraction."""
    B, ml_pad, _ = x_pad.shape
    Hp = w_pad.shape[1]
    out_full = rectangle_encoder_pallas(x_pad, w_pad, b_pad)        # (ml_pad, B*Hp)
    out = out_full.reshape(ml_pad, B, Hp)[:ml, :, :hidden]          # (ml, B, H)
    per_sample = tuple(out[:, i, :] for i in range(B))              # B x (ml, H)
    return out, per_sample


def _assemble_padded(boxes_list, ml_pad):
    """Build the zero-padded (B, ml_pad, 4) input.

    Host arrays: one numpy fill + one H2D transfer.
    Device arrays: pad lazily on device (no blocking device->host copies)."""
    if all(not isinstance(bx, jax.Array) for bx in boxes_list):
        B = len(boxes_list)
        x_np = np.zeros((B, ml_pad, 4), np.float32)
        for i, bx in enumerate(boxes_list):
            bx = np.asarray(bx, dtype=np.float32).reshape(-1, 4)
            n = bx.shape[0]
            if n:
                x_np[i, :n, :] = bx
        return jnp.asarray(x_np)
    padded = []
    for bx in boxes_list:
        bx = jnp.asarray(bx, jnp.float32)
        n = int(bx.shape[0])
        if n == 0:
            padded.append(jnp.zeros((ml_pad, 4), jnp.float32))
        elif n < ml_pad:
            padded.append(
                jnp.concatenate([bx, jnp.zeros((ml_pad - n, 4), jnp.float32)], axis=0))
        else:
            padded.append(bx)
    return jnp.stack(padded, axis=0)


class RectangleQueryEncoding:
    """JAX/Pallas port of the PyTorch RectangleQueryEncoding module."""

    def __init__(self, num_queries, hidden_dim, shuffle=False, *, key):
        self.num_queries = num_queries
        self.hidden_dim = hidden_dim
        self.shuffle = shuffle
        # nn.Linear(4, hidden_dim) default init: U(-1/sqrt(fan_in), 1/sqrt(fan_in)).
        k_w, k_b = jax.random.split(key)
        bound = 1.0 / math.sqrt(4.0)
        # Logical params (in=4, out=hidden), stored transposed for x @ W.
        self.w = jax.random.uniform(k_w, (4, hidden_dim), jnp.float32, -bound, bound)
        self.b = jax.random.uniform(k_b, (hidden_dim,), jnp.float32, -bound, bound)
        # Device-side lane-padded copies (extra columns are zero, sliced off later).
        self.hidden_pad = _round_up(hidden_dim, 128)
        self.w_dev = jnp.zeros((4, self.hidden_pad), jnp.float32).at[:, :hidden_dim].set(self.w)
        self.b_dev = jnp.zeros((1, self.hidden_pad), jnp.float32).at[0, :hidden_dim].set(self.b)

    def __call__(self, batch):
        boxes_list = [b["boxes"] for b in batch]
        ml = max(int(bx.shape[0]) for bx in boxes_list)
        if ml == 0:
            ml = 1
        ml_pad = _bucket_rows(ml)
        x_pad = _assemble_padded(boxes_list, ml_pad)
        out, per_sample = _encode_fused(
            x_pad, self.w_dev, self.b_dev, ml=ml, hidden=self.hidden_dim)

        # TODO(synk): shuffle=True uses torch.randperm (data-dependent permutation);
        # not implemented here (module default is shuffle=False).
        for i, b in enumerate(batch):
            b["boxfeat"] = per_sample[i]   # (ml, H), matches PyTorch per-sample feat

        return out  # (ml, B, H), same as torch.stack([...], dim=1)


if __name__ == "__main__":
    key = jax.random.PRNGKey(0)
    k_param, k_b0, k_b1 = jax.random.split(key, 3)

    hidden_dim = 32
    num_queries = 8  # unused by forward, kept for module parity

    # Batch of 2 samples with different numbers of boxes (variable-length).
    batch = [
        {"boxes": jax.random.uniform(k_b0, (6, 4), jnp.float32)},
        {"boxes": jax.random.uniform(k_b1, (3, 4), jnp.float32)},
    ]

    module = RectangleQueryEncoding(num_queries, hidden_dim, shuffle=False, key=k_param)
    out = module(batch)
    out = jax.block_until_ready(out)

    # Pure-JAX reference check of the hot path.
    ml = 6
    ref_rows = []
    for b in batch:
        boxes = b["boxes"]
        padded = jnp.concatenate(
            [boxes, jnp.zeros((ml - boxes.shape[0], 4), jnp.float32)], axis=0
        )
        ref_rows.append(padded @ module.w + module.b)
    ref = jnp.stack(ref_rows, axis=1)  # (ml, B, H)

    assert out.shape == (ml, 2, hidden_dim), out.shape
    np.testing.assert_allclose(np.asarray(out), np.asarray(ref), rtol=1e-5, atol=1e-5)
    # Per-sample features must match the stacked output.
    for i, b in enumerate(batch):
        np.testing.assert_allclose(
            np.asarray(b["boxfeat"]), np.asarray(ref[:, i, :]), rtol=1e-5, atol=1e-5)

    # Edge case: all-empty batch -> ml forced to 1; same bucketed kernel shape,
    # result is just the bias broadcast.
    batch_empty = [
        {"boxes": jnp.zeros((0, 4), jnp.float32)},
        {"boxes": jnp.zeros((0, 4), jnp.float32)},
    ]
    out_empty = jax.block_until_ready(module(batch_empty))
    assert out_empty.shape == (1, 2, hidden_dim), out_empty.shape
    np.testing.assert_allclose(
        np.asarray(out_empty),
        np.broadcast_to(np.asarray(module.b), (1, 2, hidden_dim)),
        rtol=1e-5, atol=1e-5,
    )

    print("KERNEL_OK")
</pallas_src>

<mosaic_0001>
module attributes {stable_mosaic.version = 11 : i64} {
  func.func @_rect_encode_kernel(%arg0: i32, %arg1: i32, %arg2: memref<1x8x4xf32, #tpu.memory_space<vmem>>, %arg3: memref<4x128xf32, #tpu.memory_space<vmem>>, %arg4: memref<1x128xf32, #tpu.memory_space<vmem>>, %arg5: memref<8x128xf32, #tpu.memory_space<vmem>>) attributes {dimension_semantics = [#tpu.dimension_semantics<parallel>, #tpu.dimension_semantics<parallel>], iteration_bounds = array<i64: 2, 1>, scalar_prefetch = 0 : i64, scratch_operands = 0 : i64, tpu.core_type = #tpu.core_type<tc>, window_params = [{transform_indices = @transform_0, window_bounds = array<i64: 1, 8, 4>}, {pipeline_mode = #tpu.pipeline_mode<synchronous>, transform_indices = @transform_1, window_bounds = array<i64: 4, 128>}, {pipeline_mode = #tpu.pipeline_mode<synchronous>, transform_indices = @transform_2, window_bounds = array<i64: 1, 128>}, {transform_indices = @transform_3, window_bounds = array<i64: 8, 128>}]} {
    %c0 = arith.constant 0 : index
    %c0_0 = arith.constant 0 : index
    %c0_1 = arith.constant 0 : index
    %0 = vector.load %arg2[%c0, %c0_0, %c0_1] : memref<1x8x4xf32, #tpu.memory_space<vmem>>, vector<1x8x4xf32>
    %1 = vector.shape_cast %0 : vector<1x8x4xf32> to vector<8x4xf32>
    %c0_2 = arith.constant 0 : index
    %c0_3 = arith.constant 0 : index
    %2 = vector.load %arg3[%c0_2, %c0_3] : memref<4x128xf32, #tpu.memory_space<vmem>>, vector<4x128xf32>
    %cst = arith.constant dense<0.000000e+00> : vector<8x128xf32>
    %3 = tpu.matmul %1, %2, %cst {dimension_numbers = #tpu.dot_dimension_numbers<[1], [0], [0], [1], [0, 0, 1, 1], [], []>} : vector<8x4xf32>, vector<4x128xf32>, vector<8x128xf32> -> vector<8x128xf32>
    %c0_4 = arith.constant 0 : index
    %c0_5 = arith.constant 0 : index
    %4 = vector.load %arg4[%c0_4, %c0_5] : memref<1x128xf32, #tpu.memory_space<vmem>>, vector<1x128xf32>
    %5 = vector.broadcast %4 : vector<1x128xf32> to vector<8x128xf32>
    %6 = arith.addf %3, %5 : vector<8x128xf32>
    %c0_6 = arith.constant 0 : index
    %c0_7 = arith.constant 0 : index
    %7 = vector.load %arg5[%c0_6, %c0_7] : memref<8x128xf32, #tpu.memory_space<vmem>>, vector<8x128xf32>
    tpu.vector_store %arg5[%c0_6, %c0_7], %6 {strides = array<i32>} : memref<8x128xf32, #tpu.memory_space<vmem>>, vector<8x128xf32>,
    return
  }
  func.func @transform_0(%arg0: i32, %arg1: i32) -> (i32, i32, i32) {
    %c0_i32 = arith.constant 0 : i32
    %c0_i32_0 = arith.constant 0 : i32
    return %arg0, %arg1, %c0_i32 : i32, i32, i32
  }
  func.func @transform_1(%arg0: i32, %arg1: i32) -> (i32, i32) {
    %c0_i32 = arith.constant 0 : i32
    %c0_i32_0 = arith.constant 0 : i32
    %c0_i32_1 = arith.constant 0 : i32
    return %c0_i32, %c0_i32_0 : i32, i32
  }
  func.func @transform_2(%arg0: i32, %arg1: i32) -> (i32, i32) {
    %c0_i32 = arith.constant 0 : i32
    %c0_i32_0 = arith.constant 0 : i32
    %c0_i32_1 = arith.constant 0 : i32
    return %c0_i32, %c0_i32_0 : i32, i32
  }
  func.func @transform_3(%arg0: i32, %arg1: i32) -> (i32, i32) {
    %c0_i32 = arith.constant 0 : i32
    return %arg1, %arg0 : i32, i32
  }
}

</mosaic_0001>

<llo_original>
// kernel: _encode_fused.1
$region0: #{_encode_fused.1}
  #allocation0 [shape = 'u32[]', space=smem, size = 0x4, offset = 0x4, fixed_abs, tag = 'smem constant byte address 0x4 - core index']
  #allocation1 [shape = 'u32[144,128]{1,0:T(1,128)}', space=vmem, size = 0x12000, scoped, tag = 'internal scratch']
  %s0 = inlined_call_operand.vmem [shape: f32[2,8,4], index: 0, kind: input, shape index: {}]
  %s1 = inlined_call_operand.vmem [shape: f32[4,128], index: 1, kind: input, shape index: {}]
  %s2 = inlined_call_operand.vmem [shape: f32[1,128], index: 2, kind: input, shape index: {}]
  %s3 = inlined_call_operand.vmem [shape: f32[8,256], index: 3, kind: output, shape index: {}]
  %s4 = sld [smem:[#allocation0]]
  $region45: #{_encode_fused.1} parent=0
    _
  %s6 = ssub.s32 1, %s4
  %s7 = scalar_select 0, %s6, %s4
  loop: start=0, step=1, limit=4
  $region2: #{_encode_fused.1} parent=0 // loop_pre_header
    _
  $region3: #{_encode_fused.1} parent=0 // loop_header
    %s9 = sphi 0, %s13
    %p10 = scmp.ge.s32.totalorder %s9, 4
    %s16 = sphi 0, %s28
    %s17 = sphi 0, %s24
    %s18 = sphi 0, %s16
    %s19 = sphi 0, %s17
    %s20 = sphi 0, %s18
    %s21 = sphi 0, %s19
    %s33 = sphi 0, %s35
    %s36 = sphi 0, %s33
    %s37 = sphi 0, %s36
    %s53 = sphi 0, %s37
    %s57 = sphi 0, %s57
    %s59 = sphi 0, %s57
    %s60 = sphi 0, %s59
    %s74 = sphi 0, %s60
    %s78 = sphi 0, %s78
    %s80 = sphi 0, %s78
    %s81 = sphi 0, %s80
    %s95 = sphi 0, %s81
    %s103 = sphi 0, %s105
    %s106 = sphi 0, %s103
    %s107 = sphi 0, %s106
    %s123 = sphi 0, %s107
  $region4: #{_encode_fused.1} parent=0 // loop_header_branch
    %12 = sbr.rel (%p10) target = $region8
  $region5: #{_encode_fused.1} parent=0 // loop_body
    %s14 = ssub.s32 %s9, 1
    %s15 = ssub.s32 %s9, 2
    %s22 = sadd.s32 1, %s17
    %p23 = scmp.ge.s32.totalorder %s22, 1
    %s24 = scalar_select %p23, 0, %s22
    %s25 = sadd.s32 1, %s16
    %s26 = scalar_select %p23, %s25, %s16
    %p27 = scmp.ge.s32.totalorder %s26, 2
    %s28 = scalar_select %p27, 0, %s26
    %s29 = ssub.s32 %s16, %s28
    %s30 = ssub.s32 %s17, %s24
    %s31 = sor.u32 %s29, %s30
    %p32 = scmp.eq.s32.totalorder %s31, 0
    %s34 = sadd.s32 %s33, 1
    %s35 = scalar_select %p32, %s33, %s34
    %p38 = pneg %p32
    %p39 = scmp.eq.s32.totalorder %s9, 1
    %p40 = por %p38, %p39
    %p41 = scmp.ne.s32.totalorder %s33, %s36
    %p42 = scmp.eq.s32.totalorder %s9, 0
    %p43 = por %p41, %p42
    %p44 = scmp.ne.s32.totalorder %s33, %s36
    %p45 = scmp.eq.s32.totalorder %s14, 1
    %p46 = por %p44, %p45
    %p47 = scmp.ne.s32.totalorder %s36, %s37
    %p48 = scmp.eq.s32.totalorder %s14, 0
    %p49 = por %p47, %p48
    %p50 = scmp.ne.s32.totalorder %s36, %s37
    %p51 = scmp.eq.s32.totalorder %s15, 1
    %p52 = por %p50, %p51
    %p54 = scmp.ne.s32.totalorder %s37, %s53
    %p55 = scmp.eq.s32.totalorder %s15, 0
    %p56 = por %p54, %p55
    %s58 = sadd.s32 %s57, 1
    %p61 = scmp.eq.s32.totalorder %s9, 1
    %p62 = scmp.ne.s32.totalorder %s57, %s59
    %p63 = scmp.eq.s32.totalorder %s9, 0
    %p64 = por %p62, %p63
    %p65 = scmp.ne.s32.totalorder %s57, %s59
    %p66 = scmp.eq.s32.totalorder %s14, 1
    %p67 = por %p65, %p66
    %p68 = scmp.ne.s32.totalorder %s59, %s60
    %p69 = scmp.eq.s32.totalorder %s14, 0
    %p70 = por %p68, %p69
    %p71 = scmp.ne.s32.totalorder %s59, %s60
    %p72 = scmp.eq.s32.totalorder %s15, 1
    %p73 = por %p71, %p72
    %p75 = scmp.ne.s32.totalorder %s60, %s74
    %p76 = scmp.eq.s32.totalorder %s15, 0
    %p77 = por %p75, %p76
    %s79 = sadd.s32 %s78, 1
    %p82 = scmp.eq.s32.totalorder %s9, 1
    %p83 = scmp.ne.s32.totalorder %s78, %s80
    %p84 = scmp.eq.s32.totalorder %s9, 0
    %p85 = por %p83, %p84
    %p86 = scmp.ne.s32.totalorder %s78, %s80
    %p87 = scmp.eq.s32.totalorder %s14, 1
    %p88 = por %p86, %p87
    %p89 = scmp.ne.s32.totalorder %s80, %s81
    %p90 = scmp.eq.s32.totalorder %s14, 0
    %p91 = por %p89, %p90
    %p92 = scmp.ne.s32.totalorder %s80, %s81
    %p93 = scmp.eq.s32.totalorder %s15, 1
    %p94 = por %p92, %p93
    %p96 = scmp.ne.s32.totalorder %s81, %s95
    %p97 = scmp.eq.s32.totalorder %s15, 0
    %p98 = por %p96, %p97
    %s99 = ssub.s32 %s17, %s24
    %s100 = ssub.s32 %s16, %s28
    %s101 = sor.u32 %s99, %s100
    %p102 = scmp.eq.s32.totalorder %s101, 0
    %s104 = sadd.s32 %s103, 1
    %s105 = scalar_select %p102, %s103, %s104
    %p108 = pneg %p102
    %p109 = scmp.eq.s32.totalorder %s9, 1
    %p110 = por %p108, %p109
    %p111 = scmp.ne.s32.totalorder %s103, %s106
    %p112 = scmp.eq.s32.totalorder %s9, 0
    %p113 = por %p111, %p112
    %p114 = scmp.ne.s32.totalorder %s103, %s106
    %p115 = scmp.eq.s32.totalorder %s14, 1
    %p116 = por %p114, %p115
    %p117 = scmp.ne.s32.totalorder %s106, %s107
    %p118 = scmp.eq.s32.totalorder %s14, 0
    %p119 = por %p117, %p118
    %p120 = scmp.ne.s32.totalorder %s106, %s107
    %p121 = scmp.eq.s32.totalorder %s15, 1
    %p122 = por %p120, %p121
    %p124 = scmp.ne.s32.totalorder %s107, %s123
    %p125 = scmp.eq.s32.totalorder %s15, 0
    %p126 = por %p124, %p125
    %p127 = scmp.le.s32.totalorder 1, %s9
    %p128 = scmp.lt.s32.totalorder %s9, 3
    %p129 = pnand %p127, %p128
    %p130 = pneg %p129
    // Predicated region
    $region9: #{_encode_fused.1} parent=5 // pred_check
      _
    $region10: #{_encode_fused.1} parent=5 // pred_check_branch
      %132 = sbr.rel (%p129) target = $region12
    $region11: #{_encode_fused.1} parent=5 // pred_region
      %s133 = ssub.s32 %s9, 1
      // Predicated region
      $region13: #{_encode_fused.1} parent=11 // pred_check
        %p134 = pneg %p70
      $region14: #{_encode_fused.1} parent=11 // pred_check_branch
        %136 = sbr.rel (%p134) target = $region16
      $region15: #{_encode_fused.1} parent=11 // pred_region
        _
      $region16: #{_encode_fused.1} parent=11 // pred_fallthru
        _
      // Predicated region
      $region17: #{_encode_fused.1} parent=11 // pred_check
        %p137 = pneg %p91
      $region18: #{_encode_fused.1} parent=11 // pred_check_branch
        %139 = sbr.rel (%p137) target = $region20
      $region19: #{_encode_fused.1} parent=11 // pred_region
        _
      $region20: #{_encode_fused.1} parent=11 // pred_fallthru
        _
    $region12: #{_encode_fused.1} parent=5 // pred_fallthru
      _
    %p140 = scmp.lt.s32.totalorder %s9, 2
    // Predicated region
    $region21: #{_encode_fused.1} parent=5 // pred_check
      %p141 = pneg %p140
    $region22: #{_encode_fused.1} parent=5 // pred_check_branch
      %143 = sbr.rel (%p141) target = $region24
    $region23: #{_encode_fused.1} parent=5 // pred_region
      // Predicated region
      $region25: #{_encode_fused.1} parent=23 // pred_check
        %p144 = pneg %p43
      $region26: #{_encode_fused.1} parent=23 // pred_check_branch
        %146 = sbr.rel (%p144) target = $region28
      $region27: #{_encode_fused.1} parent=23 // pred_region
        %p147 = scmp.lt.s32.totalorder %s16, 1
        %s148 = scalar_select %p147, %s16, 1
        %p149 = scmp.lt.s32.totalorder %s17, 0
        %s150 = scalar_select %p149, %s17, 0
        %s151 = sadd.s32 %s150, %s148
        %s152 = smul.addr %s151, 8
        %s153 = scalar_lea.vmem %s0, %s152
      $region28: #{_encode_fused.1} parent=23 // pred_fallthru
        _
    $region24: #{_encode_fused.1} parent=5 // pred_fallthru
      _
    %p154 = scmp.le.s32.totalorder 1, %s9
    %p155 = scmp.lt.s32.totalorder %s9, 3
    %p156 = pnand %p154, %p155
    %p157 = pneg %p156
    // Predicated region
    $region29: #{_encode_fused.1} parent=5 // pred_check
      _
    $region30: #{_encode_fused.1} parent=5 // pred_check_branch
      %159 = sbr.rel (%p156) target = $region32
    $region31: #{_encode_fused.1} parent=5 // pred_region
      %s160 = ssub.s32 %s9, 1
      %p161 = scmp.lt.s32.totalorder %s18, 1
      %s162 = scalar_select %p161, %s18, 1
      %p163 = scmp.lt.s32.totalorder %s19, 0
      %s164 = scalar_select %p163, %s19, 0
      %s165 = sadd.s32 %s164, %s162
      %s166 = smul.addr %s165, 8
      %s167 = scalar_lea.vmem %s0, %s166
      %p168 = pneg %p49
      %p169 = pneg %p46
      %p170 = pneg %p70
      %p171 = pneg %p67
      %p172 = pneg %p91
      %p173 = pneg %p88
      %p174 = pneg %p119
      %p175 = pneg %p116
      %p176 = scmp.lt.s32.totalorder %s19, 0
      %s177 = scalar_select %p176, %s19, 0
      %p178 = scmp.lt.s32.totalorder %s18, 1
      %s179 = scalar_select %p178, %s18, 1
      %s180 = smul.addr %s177, 2
      %s181 = sadd.s32 %s179, %s180
      %s182 = smul.addr %s181, 8
      %s183 = scalar_lea.vmem %s3, %s182
      %p184 = scmp.lt.s32.totalorder %s18, 1
      %s185 = scalar_select %p184, %s18, 1
      %p186 = scmp.lt.s32.totalorder %s19, 0
      %s187 = scalar_select %p186, %s19, 0
      %s188 = sadd.s32 %s187, %s185
      %s189 = smul.addr %s188, 8
      %s190 = scalar_lea.vmem %s0, %s189
      %p191 = scmp.lt.s32.totalorder %s19, 0
      %s192 = scalar_select %p191, %s19, 0
      %p193 = scmp.lt.s32.totalorder %s18, 1
      %s194 = scalar_select %p193, %s18, 1
      %s195 = smul.addr %s192, 2
      %s196 = sadd.s32 %s194, %s195
      %s197 = smul.addr %s196, 8
      %s198 = scalar_lea.vmem %s3, %s197
      %v199 = vld [vmem:[%s190] sm:$0xff]
      %v200 = vld [vmem:[%s1] sm:$0xf]
      %v201 = vld [vmem:[%s2] sm:$0x1]
      %v203 = vlaneseq
      %v204 = vshrl.u32 %v203, 7
      %v205 = vsub.s32 0, %v204
      %v206 = vrot.slane %v201, %v205
      %vm208 = vcmask 31744
      %v210 = vsel %vm208, %v199, 0
      %vm212 = vcmask 1043456
      %v214 = vsel %vm212, %v200, 0
      %216 = vmatprep.subr.mxu0 0.0
      %217 = vmatpush1.msra.mxu0 0.0
      %218 = vmatprep.subr.mxu0 0.0
      %219 = vmatpush1.msra.mxu0 0.0
      %220 = vmatprep.subr.mxu0 0.0
      %221 = vmatpush1.msra.mxu0 0.0
      %222 = vmatprep.subr.mxu0 0.0
      %223 = vmatpush1.msra.mxu0 0.0
      %224 = vmatprep.subr.mxu0 0.0
      %225 = vmatpush1.msra.mxu0 0.0
      %226 = vmatprep.subr.mxu0 0.0
      %227 = vmatpush1.msra.mxu0 0.0
      %228 = vmatprep.subr.mxu0 0.0
      %229 = vmatpush1.msra.mxu0 0.0
      %230 = vmatprep.subr.mxu0 0.0
      %231 = vmatpush1.msra.mxu0 0.0
      %232 = vmatprep.subr.mxu0 0.0
      %233 = vmatpush1.msra.mxu0 0.0
      %234 = vmatprep.subr.mxu0 0.0
      %235 = vmatpush1.msra.mxu0 0.0
      %236 = vmatprep.subr.mxu0 0.0
      %237 = vmatpush1.msra.mxu0 0.0
      %238 = vmatprep.subr.mxu0 0.0
      %239 = vmatpush1.msra.mxu0 0.0
      %240 = vmatprep.subr.mxu0 0.0
      %241 = vmatpush1.msra.mxu0 0.0
      %242 = vmatprep.subr.mxu0 0.0
      %243 = vmatpush1.msra.mxu0 0.0
      %244 = vmatprep.subr.mxu0 0.0
      %245 = vmatpush1.msra.mxu0 0.0
      %246 = vmatprep.subr.mxu0 0.0
      %247 = vmatpush1.msra.mxu0 %v214
      %248 = vmatprep.subr.mxu0 0.0
      %249 = vmatpush2.msra.mxu0 0.0
      %250 = vmatprep.subr.mxu0 0.0
      %251 = vmatpush2.msra.mxu0 0.0
      %252 = vmatprep.subr.mxu0 0.0
      %253 = vmatpush2.msra.mxu0 0.0
      %254 = vmatprep.subr.mxu0 0.0
      %255 = vmatpush2.msra.mxu0 0.0
      %256 = vmatprep.subr.mxu0 0.0
      %257 = vmatpush2.msra.mxu0 0.0
      %258 = vmatprep.subr.mxu0 0.0
      %259 = vmatpush2.msra.mxu0 0.0
      %260 = vmatprep.subr.mxu0 0.0
      %261 = vmatpush2.msra.mxu0 0.0
      %262 = vmatprep.subr.mxu0 0.0
      %263 = vmatpush2.msra.mxu0 0.0
      %264 = vmatprep.subr.mxu0 0.0
      %265 = vmatpush2.msra.mxu0 0.0
      %266 = vmatprep.subr.mxu0 0.0
      %267 = vmatpush2.msra.mxu0 0.0
      %268 = vmatprep.subr.mxu0 0.0
      %269 = vmatpush2.msra.mxu0 0.0
      %270 = vmatprep.subr.mxu0 0.0
      %271 = vmatpush2.msra.mxu0 0.0
      %272 = vmatprep.subr.mxu0 0.0
      %273 = vmatpush2.msra.mxu0 0.0
      %274 = vmatprep.subr.mxu0 0.0
      %275 = vmatpush2.msra.mxu0 0.0
      %276 = vmatprep.subr.mxu0 0.0
      %277 = vmatpush2.msra.mxu0 0.0
      %278 = vmatprep.subr.mxu0 0.0
      %279 = vmatpush2.msra.mxu0 0.0
      %280 = vmatprep.mubr.f32.mxu0 0.0
      %281 = vmatmul.mubr.f32.gmra.mxu0 %v210
      %v282 = vpop.f32.mrf.mxu0
      %v283 = vadd.f32 %v206, %v282
      %v284 = vpop.f32.mrf.mxu0
      %285 = vdwg.mxu0
      %286 = vst [vmem:[%s198] sm:$0xff] %v283
      %p287 = scmp.lt.s32.totalorder %s19, 0
      %s288 = scalar_select %p287, %s19, 0
      %p289 = scmp.lt.s32.totalorder %s18, 1
      %s290 = scalar_select %p289, %s18, 1
      %s291 = smul.addr %s288, 2
      %s292 = sadd.s32 %s290, %s291
      %s293 = smul.addr %s292, 8
      %s294 = scalar_lea.vmem %s3, %s293
      // Predicated region
      $region33: #{_encode_fused.1} parent=31 // pred_check
        %p295 = pneg %p116
      $region34: #{_encode_fused.1} parent=31 // pred_check_branch
        %297 = sbr.rel (%p295) target = $region36
      $region35: #{_encode_fused.1} parent=31 // pred_region
        _
      $region36: #{_encode_fused.1} parent=31 // pred_fallthru
        _
    $region32: #{_encode_fused.1} parent=5 // pred_fallthru
      _
    %p298 = scmp.le.s32.totalorder 2, %s9
    // Predicated region
    $region37: #{_encode_fused.1} parent=5 // pred_check
      %p299 = pneg %p298
    $region38: #{_encode_fused.1} parent=5 // pred_check_branch
      %301 = sbr.rel (%p299) target = $region40
    $region39: #{_encode_fused.1} parent=5 // pred_region
      %s302 = ssub.s32 %s9, 2
      // Predicated region
      $region41: #{_encode_fused.1} parent=39 // pred_check
        %p303 = pneg %p122
      $region42: #{_encode_fused.1} parent=39 // pred_check_branch
        %305 = sbr.rel (%p303) target = $region44
      $region43: #{_encode_fused.1} parent=39 // pred_region
        %p306 = scmp.lt.s32.totalorder %s21, 0
        %s307 = scalar_select %p306, %s21, 0
        %p308 = scmp.lt.s32.totalorder %s20, 1
        %s309 = scalar_select %p308, %s20, 1
        %s310 = smul.addr %s307, 2
        %s311 = sadd.s32 %s309, %s310
        %s312 = smul.addr %s311, 8
        %s313 = scalar_lea.vmem %s3, %s312
      $region44: #{_encode_fused.1} parent=39 // pred_fallthru
        _
    $region40: #{_encode_fused.1} parent=5 // pred_fallthru
      _
  $region6: #{_encode_fused.1} parent=0 // loop_footer
    %s13 = sadd.s32 1, %s9
  $region7: #{_encode_fused.1} parent=0 // loop_footer_branch
    %8 = sbr.rel target = $region3
  $region8: #{_encode_fused.1} parent=0 // loop_exit
    _

</llo_original>
